<compile_context>
chip_gen: v7x
topology: tpu7x:2x2x1
jax: 0.10.0
libtpu: 0.0.40
codegen_flags: <defaults>
</compile_context>

<pallas_src>
import jax
import jax.numpy as jnp
from jax import lax
from jax.experimental import pallas as pl
from jax.experimental.pallas import tpu as pltpu

BLOCK_SIZE = 8          # max sequence length
N_EMB = 32
N_HEADS = 4
HEAD_SIZE = N_EMB // N_HEADS


def _pick_bt(batch, seq_len):
    """Sequences per grid step.

    For tiny problems (B*T <= 64 rows) use a single grid step (bt = B): per-step
    overhead (~0.35 us) dominates, and splitting across v7x's two TensorCores just
    duplicates prologue cost for near-zero compute per core.  Otherwise cap the
    per-step row count F = bt*T at ~64 so the flattened block-diagonal softmax
    does not blow up exp/select work quadratically, while still filling MXU rows.
    """
    if batch * seq_len <= 64:
        return batch
    for cand in range(batch, 0, -1):
        if batch % cand == 0 and cand * seq_len <= 64:
            return cand
    return 1


def _make_kernel(n_heads, head_size, matmul_dtype):
    h = n_heads
    hs = head_size
    hh = h * hs

    def kernel(x_ref, wq_ref, wk_ref, wv_ref, bias_ref, hmask_ref, o_ref):
        # x_ref:    (F, C)       F = bt*T flattened (sequence, position) rows
        # wq_ref:   (C, H*hs)    Q weights, scale pre-folded, resident
        # wk_ref:   (C, H*hs)    K weights, resident
        # wv_ref:   (C, H*hs)    V weights, resident
        # bias_ref: (H*F, F)     additive 0 / -1e30 block-diag causal mask, resident
        # hmask_ref:(H*F, H*hs)  1.0 where row-block head == column head, resident
        # o_ref:    (F, H*hs)    head-concatenated output rows
        f = x_ref.shape[0]

        x2d = x_ref[...].astype(matmul_dtype)                                # (F, C)

        # Projections.  Scale is already folded into wq; weights already in
        # matmul_dtype (cast once in the wrapper).  K is produced directly in
        # transposed (H*hs, F) layout so the score matmul needs no transpose.
        q = jnp.dot(x2d, wq_ref[...], preferred_element_type=jnp.float32)    # (F, hh)
        v = jnp.dot(x2d, wv_ref[...], preferred_element_type=jnp.float32)    # (F, hh)
        kT = lax.dot_general(wk_ref[...], x2d, (((0,), (1,)), ((), ())),
                             preferred_element_type=jnp.float32)             # (hh, F)

        hmask = hmask_ref[...]                                               # (H*F, hh)

        # Head-stacked queries: rows [g*F:(g+1)*F] hold q with only head-g columns
        # kept, so a single matmul yields every head's (F, F) score block stacked
        # along rows.  The concat pieces are F(=16)-row, i.e. sublane-aligned.
        q_bd = jnp.concatenate([q] * h, axis=0) * hmask                      # (H*F, hh)
        s = jnp.dot(q_bd.astype(matmul_dtype), kT.astype(matmul_dtype),
                    preferred_element_type=jnp.float32)                      # (H*F, F)
        s = s + bias_ref[...]            # block-diagonal causal mask (precomputed)

        # fp32 softmax (exact per-(head, query) max; masked entries underflow to 0).
        m = jnp.max(s, axis=-1, keepdims=True)
        e = jnp.exp(s - m)
        denom = jnp.sum(e, axis=-1, keepdims=True)       # >= 1 (causal diagonal)
        p = e * pl.reciprocal(denom, approx=True)        # EUP slot, ~free

        # One PV matmul for all heads, then keep only the matching head's columns
        # per row block and fold the H row blocks back onto the F output rows.
        o_big = jnp.dot(p.astype(matmul_dtype), v.astype(matmul_dtype),
                        preferred_element_type=jnp.float32)                  # (H*F, hh)
        o_big = o_big * hmask
        out = o_big[0:f, :]
        for g in range(1, h):                              # static unroll, H = 4
            out = out + o_big[g * f:(g + 1) * f, :]

        o_ref[...] = out.astype(o_ref.dtype)

    return kernel


def multi_head_attention(x, wq, wk, wv, *, matmul_dtype=jnp.float32, bt=None):
    """x: (B, T, C); wq/wk/wv: (H, C, hs) per-head nn.Linear weights (transposed,
    i.e. x @ wq[h] == nn.Linear(C, hs, bias=False)(x) for head h).
    Returns (B, T, H*hs), matching torch.cat over heads on the last dim."""
    B, T, C = x.shape
    H, _, hs = wq.shape
    hh = H * hs
    if bt is None:
        bt = _pick_bt(B, T)
    assert B % bt == 0
    F = bt * T

    # --- Layout / invariant plumbing done ONCE in the wrapper (never per step) ---
    scale = jnp.float32(hs ** -0.5)
    to_cols = lambda w: jnp.transpose(w, (1, 0, 2)).reshape(C, hh)  # torch.cat order
    w_q = (to_cols(wq) * scale).astype(matmul_dtype)                # scale folded in
    w_k = to_cols(wk).astype(matmul_dtype)
    w_v = to_cols(wv).astype(matmul_dtype)

    # Block-diagonal (per-sequence) causal mask as an additive bias, tiled per head
    # row-block: shape (H*F, F), values 0 (keep) / -1e30 (mask).
    r = jnp.arange(F)[:, None]          # query row within the block
    c = jnp.arange(F)[None, :]          # key row within the block
    valid = (r // T == c // T) & (c <= r)
    bias = jnp.where(valid, 0.0, -1e30).astype(jnp.float32)         # (F, F)
    bias_big = jnp.tile(bias, (H, 1))                               # (H*F, F)

    # Head-selection mask: row block g <-> output columns of head g.
    g_row = (jnp.arange(H * F) // F)[:, None]                       # (H*F, 1)
    h_col = (jnp.arange(hh) // hs)[None, :]                         # (1, hh)
    hmask = (g_row == h_col).astype(jnp.float32)                    # (H*F, hh)

    # Flat 2-D I/O: every block below is a full contiguous array slab.
    x_flat = x.reshape(B * T, C)

    kernel = _make_kernel(H, hs, matmul_dtype)
    out_flat = pl.pallas_call(
        kernel,
        out_shape=jax.ShapeDtypeStruct((B * T, hh), x.dtype),
        grid_spec=pltpu.PrefetchScalarGridSpec(
            num_scalar_prefetch=0,
            grid=(B // bt,),
            in_specs=[
                pl.BlockSpec((F, C), lambda b: (b, 0)),
                pl.BlockSpec((C, hh), lambda b: (0, 0)),        # resident
                pl.BlockSpec((C, hh), lambda b: (0, 0)),        # resident
                pl.BlockSpec((C, hh), lambda b: (0, 0)),        # resident
                pl.BlockSpec((H * F, F), lambda b: (0, 0)),     # resident
                pl.BlockSpec((H * F, hh), lambda b: (0, 0)),    # resident
            ],
            out_specs=pl.BlockSpec((F, hh), lambda b: (b, 0)),
        ),
        compiler_params=pltpu.CompilerParams(
            dimension_semantics=("parallel",)),
    )(x_flat, w_q, w_k, w_v, bias_big, hmask)
    return out_flat.reshape(B, T, hh)


def reference(x, wq, wk, wv):
    """Pure-JAX reference mirroring the PyTorch forward pass (fp32)."""
    B, T, _ = x.shape
    q = jnp.einsum('btc,hcd->bhtd', x, wq)
    k = jnp.einsum('btc,hcd->bhtd', x, wk)
    v = jnp.einsum('btc,hcd->bhtd', x, wv)
    s = jnp.einsum('bhtd,bhsd->bhts', q, k) * (HEAD_SIZE ** -0.5)
    mask = jnp.tril(jnp.ones((T, T), dtype=bool))
    s = jnp.where(mask, s, -jnp.inf)
    p = jax.nn.softmax(s, axis=-1)
    o = jnp.einsum('bhts,bhsd->bhtd', p, v)
    return jnp.transpose(o, (0, 2, 1, 3)).reshape(B, T, -1)


if __name__ == "__main__":
    key = jax.random.PRNGKey(0)
    kx, kq, kk, kv = jax.random.split(key, 4)

    B, T = 2, BLOCK_SIZE
    bound = 1.0 / (N_EMB ** 0.5)
    x = jax.random.normal(kx, (B, T, N_EMB), dtype=jnp.float32)
    wq = jax.random.uniform(kq, (N_HEADS, N_EMB, HEAD_SIZE),
                            minval=-bound, maxval=bound, dtype=jnp.float32)
    wk = jax.random.uniform(kk, (N_HEADS, N_EMB, HEAD_SIZE),
                            minval=-bound, maxval=bound, dtype=jnp.float32)
    wv = jax.random.uniform(kv, (N_HEADS, N_EMB, HEAD_SIZE),
                            minval=-bound, maxval=bound, dtype=jnp.float32)

    ref = reference(x, wq, wk, wv)

    # fp32 matmul path (only approximation is the EUP reciprocal).
    out = multi_head_attention(x, wq, wk, wv)
    out = jax.block_until_ready(out)
    assert out.shape == (B, T, N_EMB), out.shape
    assert jnp.allclose(out, ref, atol=2e-3, rtol=2e-3), "fp32 mismatch vs reference"

    # bf16 MXU-operand path (weights cast once in the wrapper, fp32 accumulation
    # and fp32 softmax), looser tolerance.
    out_bf16 = multi_head_attention(x, wq, wk, wv, matmul_dtype=jnp.bfloat16)
    out_bf16 = jax.block_until_ready(out_bf16)
    assert jnp.allclose(out_bf16, ref, atol=5e-2, rtol=5e-2), "bf16 mismatch vs reference"

    print("KERNEL_OK")
</pallas_src>

<mosaic_0001>
module attributes {stable_mosaic.version = 11 : i64} {
  func.func @kernel(%arg0: i32, %arg1: memref<16x32xf32, #tpu.memory_space<vmem>>, %arg2: memref<32x32xf32, #tpu.memory_space<vmem>>, %arg3: memref<32x32xf32, #tpu.memory_space<vmem>>, %arg4: memref<32x32xf32, #tpu.memory_space<vmem>>, %arg5: memref<64x16xf32, #tpu.memory_space<vmem>>, %arg6: memref<64x32xf32, #tpu.memory_space<vmem>>, %arg7: memref<16x32xf32, #tpu.memory_space<vmem>>) attributes {dimension_semantics = [#tpu.dimension_semantics<parallel>], iteration_bounds = array<i64: 1>, scalar_prefetch = 0 : i64, scratch_operands = 0 : i64, tpu.core_type = #tpu.core_type<tc>, window_params = [{transform_indices = @transform_0, window_bounds = array<i64: 16, 32>}, {pipeline_mode = #tpu.pipeline_mode<synchronous>, transform_indices = @transform_1, window_bounds = array<i64: 32, 32>}, {pipeline_mode = #tpu.pipeline_mode<synchronous>, transform_indices = @transform_2, window_bounds = array<i64: 32, 32>}, {pipeline_mode = #tpu.pipeline_mode<synchronous>, transform_indices = @transform_3, window_bounds = array<i64: 32, 32>}, {pipeline_mode = #tpu.pipeline_mode<synchronous>, transform_indices = @transform_4, window_bounds = array<i64: 64, 16>}, {pipeline_mode = #tpu.pipeline_mode<synchronous>, transform_indices = @transform_5, window_bounds = array<i64: 64, 32>}, {transform_indices = @transform_6, window_bounds = array<i64: 16, 32>}]} {
    %c0 = arith.constant 0 : index
    %c0_0 = arith.constant 0 : index
    %0 = vector.load %arg1[%c0, %c0_0] : memref<16x32xf32, #tpu.memory_space<vmem>>, vector<16x32xf32>
    %c0_1 = arith.constant 0 : index
    %c0_2 = arith.constant 0 : index
    %1 = vector.load %arg2[%c0_1, %c0_2] : memref<32x32xf32, #tpu.memory_space<vmem>>, vector<32x32xf32>
    %cst = arith.constant dense<0.000000e+00> : vector<16x32xf32>
    %2 = tpu.matmul %0, %1, %cst {dimension_numbers = #tpu.dot_dimension_numbers<[1], [0], [0], [1], [0, 0, 1, 1], [], []>} : vector<16x32xf32>, vector<32x32xf32>, vector<16x32xf32> -> vector<16x32xf32>
    %c0_3 = arith.constant 0 : index
    %c0_4 = arith.constant 0 : index
    %3 = vector.load %arg4[%c0_3, %c0_4] : memref<32x32xf32, #tpu.memory_space<vmem>>, vector<32x32xf32>
    %cst_5 = arith.constant dense<0.000000e+00> : vector<16x32xf32>
    %4 = tpu.matmul %0, %3, %cst_5 {dimension_numbers = #tpu.dot_dimension_numbers<[1], [0], [0], [1], [0, 0, 1, 1], [], []>} : vector<16x32xf32>, vector<32x32xf32>, vector<16x32xf32> -> vector<16x32xf32>
    %c0_6 = arith.constant 0 : index
    %c0_7 = arith.constant 0 : index
    %5 = vector.load %arg3[%c0_6, %c0_7] : memref<32x32xf32, #tpu.memory_space<vmem>>, vector<32x32xf32>
    %cst_8 = arith.constant dense<0.000000e+00> : vector<32x16xf32>
    %6 = tpu.matmul %5, %0, %cst_8 {dimension_numbers = #tpu.dot_dimension_numbers<[0], [1], [1], [0], [0, 1, 1, 0], [], []>} : vector<32x32xf32>, vector<16x32xf32>, vector<32x16xf32> -> vector<32x16xf32>
    %c0_9 = arith.constant 0 : index
    %c0_10 = arith.constant 0 : index
    %7 = vector.load %arg6[%c0_9, %c0_10] : memref<64x32xf32, #tpu.memory_space<vmem>>, vector<64x32xf32>
    %8 = tpu.concatenate %2, %2, %2, %2 in 0 : vector<16x32xf32>, vector<16x32xf32>, vector<16x32xf32>, vector<16x32xf32> -> vector<64x32xf32>
    %9 = arith.mulf %8, %7 : vector<64x32xf32>
    %cst_11 = arith.constant dense<0.000000e+00> : vector<64x16xf32>
    %10 = tpu.matmul %9, %6, %cst_11 {dimension_numbers = #tpu.dot_dimension_numbers<[1], [0], [0], [1], [0, 0, 1, 1], [], []>} : vector<64x32xf32>, vector<32x16xf32>, vector<64x16xf32> -> vector<64x16xf32>
    %c0_12 = arith.constant 0 : index
    %c0_13 = arith.constant 0 : index
    %11 = vector.load %arg5[%c0_12, %c0_13] : memref<64x16xf32, #tpu.memory_space<vmem>>, vector<64x16xf32>
    %12 = arith.addf %10, %11 : vector<64x16xf32>
    %cst_14 = arith.constant dense<0xFF800000> : vector<64xf32>
    %13 = vector.multi_reduction <maximumf>, %12, %cst_14 [1] : vector<64x16xf32> to vector<64xf32>
    %14 = vector.shape_cast %13 : vector<64xf32> to vector<64x1xf32>
    %15 = vector.broadcast %14 : vector<64x1xf32> to vector<64x16xf32>
    %16 = arith.subf %12, %15 : vector<64x16xf32>
    %17 = math.exp %16 : vector<64x16xf32>
    %cst_15 = arith.constant dense<0.000000e+00> : vector<64xf32>
    %18 = vector.multi_reduction <add>, %17, %cst_15 [1] : vector<64x16xf32> to vector<64xf32>
    %19 = vector.shape_cast %18 : vector<64xf32> to vector<64x1xf32>
    %20 = tpu.reciprocal %19 {approx = true} : vector<64x1xf32> -> vector<64x1xf32>
    %21 = vector.broadcast %20 : vector<64x1xf32> to vector<64x16xf32>
    %22 = arith.mulf %17, %21 : vector<64x16xf32>
    %cst_16 = arith.constant dense<0.000000e+00> : vector<64x32xf32>
    %23 = tpu.matmul %22, %4, %cst_16 {dimension_numbers = #tpu.dot_dimension_numbers<[1], [0], [0], [1], [0, 0, 1, 1], [], []>} : vector<64x16xf32>, vector<16x32xf32>, vector<64x32xf32> -> vector<64x32xf32>
    %24 = arith.mulf %23, %7 : vector<64x32xf32>
    %25 = vector.extract_strided_slice %24 {offsets = [0, 0], sizes = [16, 32], strides = [1, 1]} : vector<64x32xf32> to vector<16x32xf32>
    %26 = vector.extract_strided_slice %24 {offsets = [16, 0], sizes = [16, 32], strides = [1, 1]} : vector<64x32xf32> to vector<16x32xf32>
    %27 = arith.addf %25, %26 : vector<16x32xf32>
    %28 = vector.extract_strided_slice %24 {offsets = [32, 0], sizes = [16, 32], strides = [1, 1]} : vector<64x32xf32> to vector<16x32xf32>
    %29 = arith.addf %27, %28 : vector<16x32xf32>
    %30 = vector.extract_strided_slice %24 {offsets = [48, 0], sizes = [16, 32], strides = [1, 1]} : vector<64x32xf32> to vector<16x32xf32>
    %31 = arith.addf %29, %30 : vector<16x32xf32>
    %c0_17 = arith.constant 0 : index
    %c0_18 = arith.constant 0 : index
    %32 = vector.load %arg7[%c0_17, %c0_18] : memref<16x32xf32, #tpu.memory_space<vmem>>, vector<16x32xf32>
    tpu.vector_store %arg7[%c0_17, %c0_18], %31 {strides = array<i32>} : memref<16x32xf32, #tpu.memory_space<vmem>>, vector<16x32xf32>,
    return
  }
  func.func @transform_0(%arg0: i32) -> (i32, i32) {
    %c0_i32 = arith.constant 0 : i32
    %c0_i32_0 = arith.constant 0 : i32
    return %arg0, %c0_i32 : i32, i32
  }
  func.func @transform_1(%arg0: i32) -> (i32, i32) {
    %c0_i32 = arith.constant 0 : i32
    %c0_i32_0 = arith.constant 0 : i32
    %c0_i32_1 = arith.constant 0 : i32
    return %c0_i32, %c0_i32_0 : i32, i32
  }
  func.func @transform_2(%arg0: i32) -> (i32, i32) {
    %c0_i32 = arith.constant 0 : i32
    %c0_i32_0 = arith.constant 0 : i32
    %c0_i32_1 = arith.constant 0 : i32
    return %c0_i32, %c0_i32_0 : i32, i32
  }
  func.func @transform_3(%arg0: i32) -> (i32, i32) {
    %c0_i32 = arith.constant 0 : i32
    %c0_i32_0 = arith.constant 0 : i32
    %c0_i32_1 = arith.constant 0 : i32
    return %c0_i32, %c0_i32_0 : i32, i32
  }
  func.func @transform_4(%arg0: i32) -> (i32, i32) {
    %c0_i32 = arith.constant 0 : i32
    %c0_i32_0 = arith.constant 0 : i32
    %c0_i32_1 = arith.constant 0 : i32
    return %c0_i32, %c0_i32_0 : i32, i32
  }
  func.func @transform_5(%arg0: i32) -> (i32, i32) {
    %c0_i32 = arith.constant 0 : i32
    %c0_i32_0 = arith.constant 0 : i32
    %c0_i32_1 = arith.constant 0 : i32
    return %c0_i32, %c0_i32_0 : i32, i32
  }
  func.func @transform_6(%arg0: i32) -> (i32, i32) {
    %c0_i32 = arith.constant 0 : i32
    %c0_i32_0 = arith.constant 0 : i32
    return %arg0, %c0_i32 : i32, i32
  }
}

</mosaic_0001>

<llo_original>
// kernel: tpu_custom_call.1
$region0: #{tpu_custom_call.1}
  #allocation0 [shape = 'u32[]', space=smem, size = 0x4, offset = 0x4, fixed_abs, tag = 'smem constant byte address 0x4 - core index']
  #allocation1 [shape = 'u32[144,128]{1,0:T(1,128)}', space=vmem, size = 0x12000, scoped, tag = 'internal scratch']
  %s0 = inlined_call_operand.vmem [shape: f32[16,32], index: 0, kind: input, shape index: {}]
  %s1 = inlined_call_operand.vmem [shape: f32[32,32], index: 1, kind: input, shape index: {}]
  %s2 = inlined_call_operand.vmem [shape: f32[32,32], index: 2, kind: input, shape index: {}]
  %s3 = inlined_call_operand.vmem [shape: f32[32,32], index: 3, kind: input, shape index: {}]
  %s4 = inlined_call_operand.vmem [shape: f32[64,16], index: 4, kind: input, shape index: {}]
  %s5 = inlined_call_operand.vmem [shape: f32[64,32], index: 5, kind: input, shape index: {}]
  %s6 = inlined_call_operand.hbm [shape: f32[16,32], index: 6, kind: output, shape index: {}]
  %s7 = sld [smem:[#allocation0]]
  $region34: #{tpu_custom_call.1} parent=0
    _
  %s9 = ssub.s32 1, %s7
  %s10 = scalar_select 0, %s9, %s7
  $region1: #{tpu_custom_call.1} parent=0
    #allocation2 [shape = 'u8[8192]{0}', space=vmem, size = 0x2000, scoped, tag = 'output window, operand 0, single buffered']
    #allocation3 [shape = 's32[1]{0}', space=sflag, size = 0x4, scoped, tag = 'scoped memory for tpu_custom_call.1']
    %11 = vsyncpa [#allocation3], 0
    // Predicated region
    $region2: #{tpu_custom_call.1} parent=1 // pred_check
      _
    $region3: #{tpu_custom_call.1} parent=1 // pred_check_branch
      %13 = sbr.rel (0) target = $region5
    $region4: #{tpu_custom_call.1} parent=1 // pred_region
      _
    $region5: #{tpu_custom_call.1} parent=1 // pred_fallthru
      _
    // Predicated region
    $region6: #{tpu_custom_call.1} parent=1 // pred_check
      _
    $region7: #{tpu_custom_call.1} parent=1 // pred_check_branch
      %15 = sbr.rel (0) target = $region9
    $region8: #{tpu_custom_call.1} parent=1 // pred_region
      _
    $region9: #{tpu_custom_call.1} parent=1 // pred_fallthru
      _
    // Predicated region
    $region10: #{tpu_custom_call.1} parent=1 // pred_check
      _
    $region11: #{tpu_custom_call.1} parent=1 // pred_check_branch
      %17 = sbr.rel (0) target = $region13
    $region12: #{tpu_custom_call.1} parent=1 // pred_region
      _
    $region13: #{tpu_custom_call.1} parent=1 // pred_fallthru
      _
    // Predicated region
    $region14: #{tpu_custom_call.1} parent=1 // pred_check
      _
    $region15: #{tpu_custom_call.1} parent=1 // pred_check_branch
      %19 = sbr.rel (0) target = $region17
    $region16: #{tpu_custom_call.1} parent=1 // pred_region
      _
    $region17: #{tpu_custom_call.1} parent=1 // pred_fallthru
      _
    // Predicated region
    $region18: #{tpu_custom_call.1} parent=1 // pred_check
      _
    $region19: #{tpu_custom_call.1} parent=1 // pred_check_branch
      %21 = sbr.rel (0) target = $region21
    $region20: #{tpu_custom_call.1} parent=1 // pred_region
      _
    $region21: #{tpu_custom_call.1} parent=1 // pred_fallthru
      _
    // Predicated region
    $region22: #{tpu_custom_call.1} parent=1 // pred_check
      _
    $region23: #{tpu_custom_call.1} parent=1 // pred_check_branch
      %23 = sbr.rel (0) target = $region25
    $region24: #{tpu_custom_call.1} parent=1 // pred_region
      _
    $region25: #{tpu_custom_call.1} parent=1 // pred_fallthru
      _
    %v24 = vld [vmem:[%s0] sm:$0xff]
    %v25 = vld [vmem:[%s0 + $0x8] sm:$0xff]
    %v26 = vld [vmem:[%s1] sm:$0xff]
    %v27 = vld [vmem:[%s1 + $0x8] sm:$0xff]
    %v28 = vld [vmem:[%s1 + $0x10] sm:$0xff]
    %v29 = vld [vmem:[%s1 + $0x18] sm:$0xff]
    %vm30 = vcmask 261120
    %v32 = vsel %vm30, %v24, 0
    %v35 = vsel %vm30, %v25, 0
    %37 = vmatprep.subr.mxu0 0.0
    %38 = vmatpush1.msra.mxu0 %v26
    %39 = vmatprep.subr.mxu0 0.0
    %40 = vmatpush1.msra.mxu0 %v27
    %41 = vmatprep.subr.mxu0 0.0
    %42 = vmatpush1.msra.mxu0 %v28
    %43 = vmatprep.subr.mxu0 0.0
    %44 = vmatpush1.msra.mxu0 %v29
    %45 = vmatprep.subr.mxu0 0.0
    %46 = vmatpush1.msra.mxu0 0.0
    %47 = vmatprep.subr.mxu0 0.0
    %48 = vmatpush1.msra.mxu0 0.0
    %49 = vmatprep.subr.mxu0 0.0
    %50 = vmatpush1.msra.mxu0 0.0
    %51 = vmatprep.subr.mxu0 0.0
    %52 = vmatpush1.msra.mxu0 0.0
    %53 = vmatprep.subr.mxu0 0.0
    %54 = vmatpush1.msra.mxu0 0.0
    %55 = vmatprep.subr.mxu0 0.0
    %56 = vmatpush1.msra.mxu0 0.0
    %57 = vmatprep.subr.mxu0 0.0
    %58 = vmatpush1.msra.mxu0 0.0
    %59 = vmatprep.subr.mxu0 0.0
    %60 = vmatpush1.msra.mxu0 0.0
    %61 = vmatprep.subr.mxu0 0.0
    %62 = vmatpush1.msra.mxu0 0.0
    %63 = vmatprep.subr.mxu0 0.0
    %64 = vmatpush1.msra.mxu0 0.0
    %65 = vmatprep.subr.mxu0 0.0
    %66 = vmatpush1.msra.mxu0 0.0
    %67 = vmatprep.subr.mxu0 0.0
    %68 = vmatpush1.msra.mxu0 0.0
    %69 = vmatprep.subr.mxu0 0.0
    %70 = vmatpush1.msra.mxu0 0.0
    %71 = vmatprep.subr.mxu0 0.0
    %72 = vmatpush1.msra.mxu0 0.0
    %73 = vmatprep.subr.mxu0 0.0
    %74 = vmatpush1.msra.mxu0 0.0
    %75 = vmatprep.subr.mxu0 0.0
    %76 = vmatpush1.msra.mxu0 0.0
    %77 = vmatprep.subr.mxu0 0.0
    %78 = vmatpush1.msra.mxu0 0.0
    %79 = vmatprep.subr.mxu0 0.0
    %80 = vmatpush1.msra.mxu0 0.0
    %81 = vmatprep.subr.mxu0 0.0
    %82 = vmatpush1.msra.mxu0 0.0
    %83 = vmatprep.subr.mxu0 0.0
    %84 = vmatpush1.msra.mxu0 0.0
    %85 = vmatprep.subr.mxu0 0.0
    %86 = vmatpush1.msra.mxu0 0.0
    %87 = vmatprep.subr.mxu0 0.0
    %88 = vmatpush1.msra.mxu0 0.0
    %89 = vmatprep.subr.mxu0 0.0
    %90 = vmatpush1.msra.mxu0 0.0
    %91 = vmatprep.subr.mxu0 0.0
    %92 = vmatpush1.msra.mxu0 0.0
    %93 = vmatprep.subr.mxu0 0.0
    %94 = vmatpush1.msra.mxu0 0.0
    %95 = vmatprep.subr.mxu0 0.0
    %96 = vmatpush1.msra.mxu0 0.0
    %97 = vmatprep.subr.mxu0 0.0
    %98 = vmatpush1.msra.mxu0 0.0
    %99 = vmatprep.subr.mxu0 0.0
    %100 = vmatpush1.msra.mxu0 0.0
    %101 = vmatprep.mubr.f32.mxu0 0.0
    %102 = vmatmul.mubr.f32.gmra.mrb[0].mxu0 %v32
    %v103 = vpop.f32.mrb[0].mxu0
    %v104 = vadd.f32 0.0, %v103
    %v105 = vpop.f32.mrb[0].mxu0
    %106 = vmatprep.mubr.f32.mxu0 0.0
    %107 = vmatmul.mubr.f32.gmra.mrb[0].mxu0 %v35
    %v108 = vpop.f32.mrb[0].mxu0
    %v109 = vadd.f32 0.0, %v108
    %v110 = vpop.f32.mrb[0].mxu0
    %111 = vdwg.mxu0
    %v112 = vld [vmem:[%s3] sm:$0xff]
    %v113 = vld [vmem:[%s3 + $0x8] sm:$0xff]
    %v114 = vld [vmem:[%s3 + $0x10] sm:$0xff]
    %v115 = vld [vmem:[%s3 + $0x18] sm:$0xff]
    %116 = vmatprep.subr.mxu0 0.0
    %117 = vmatpush1.msra.mxu0 %v112
    %118 = vmatprep.subr.mxu0 0.0
    %119 = vmatpush1.msra.mxu0 %v113
    %120 = vmatprep.subr.mxu0 0.0
    %121 = vmatpush1.msra.mxu0 %v114
    %122 = vmatprep.subr.mxu0 0.0
    %123 = vmatpush1.msra.mxu0 %v115
    %124 = vmatprep.subr.mxu0 0.0
    %125 = vmatpush1.msra.mxu0 0.0
    %126 = vmatprep.subr.mxu0 0.0
    %127 = vmatpush1.msra.mxu0 0.0
    %128 = vmatprep.subr.mxu0 0.0
    %129 = vmatpush1.msra.mxu0 0.0
    %130 = vmatprep.subr.mxu0 0.0
    %131 = vmatpush1.msra.mxu0 0.0
    %132 = vmatprep.subr.mxu0 0.0
    %133 = vmatpush1.msra.mxu0 0.0
    %134 = vmatprep.subr.mxu0 0.0
    %135 = vmatpush1.msra.mxu0 0.0
    %136 = vmatprep.subr.mxu0 0.0
    %137 = vmatpush1.msra.mxu0 0.0
    %138 = vmatprep.subr.mxu0 0.0
    %139 = vmatpush1.msra.mxu0 0.0
    %140 = vmatprep.subr.mxu0 0.0
    %141 = vmatpush1.msra.mxu0 0.0
    %142 = vmatprep.subr.mxu0 0.0
    %143 = vmatpush1.msra.mxu0 0.0
    %144 = vmatprep.subr.mxu0 0.0
    %145 = vmatpush1.msra.mxu0 0.0
    %146 = vmatprep.subr.mxu0 0.0
    %147 = vmatpush1.msra.mxu0 0.0
    %148 = vmatprep.subr.mxu0 0.0
    %149 = vmatpush1.msra.mxu0 0.0
    %150 = vmatprep.subr.mxu0 0.0
    %151 = vmatpush1.msra.mxu0 0.0
    %152 = vmatprep.subr.mxu0 0.0
    %153 = vmatpush1.msra.mxu0 0.0
    %154 = vmatprep.subr.mxu0 0.0
    %155 = vmatpush1.msra.mxu0 0.0
    %156 = vmatprep.subr.mxu0 0.0
    %157 = vmatpush1.msra.mxu0 0.0
    %158 = vmatprep.subr.mxu0 0.0
    %159 = vmatpush1.msra.mxu0 0.0
    %160 = vmatprep.subr.mxu0 0.0
    %161 = vmatpush1.msra.mxu0 0.0
    %162 = vmatprep.subr.mxu0 0.0
    %163 = vmatpush1.msra.mxu0 0.0
    %164 = vmatprep.subr.mxu0 0.0
    %165 = vmatpush1.msra.mxu0 0.0
    %166 = vmatprep.subr.mxu0 0.0
    %167 = vmatpush1.msra.mxu0 0.0
    %168 = vmatprep.subr.mxu0 0.0
    %169 = vmatpush1.msra.mxu0 0.0
    %170 = vmatprep.subr.mxu0 0.0
    %171 = vmatpush1.msra.mxu0 0.0
    %172 = vmatprep.subr.mxu0 0.0
    %173 = vmatpush1.msra.mxu0 0.0
    %174 = vmatprep.subr.mxu0 0.0
    %175 = vmatpush1.msra.mxu0 0.0
    %176 = vmatprep.subr.mxu0 0.0
    %177 = vmatpush1.msra.mxu0 0.0
    %178 = vmatprep.subr.mxu0 0.0
    %179 = vmatpush1.msra.mxu0 0.0
    %180 = vmatprep.mubr.f32.mxu0 0.0
    %181 = vmatmul.mubr.f32.gmra.mrb[0].mxu0 %v32
    %v182 = vpop.f32.mrb[0].mxu0
    %v183 = vadd.f32 0.0, %v182
    %v184 = vpop.f32.mrb[0].mxu0
    %185 = vmatprep.mubr.f32.mxu0 0.0
    %186 = vmatmul.mubr.f32.gmra.mrb[0].mxu0 %v35
    %v187 = vpop.f32.mrb[0].mxu0
    %v188 = vadd.f32 0.0, %v187
    %v189 = vpop.f32.mrb[0].mxu0
    %190 = vdwg.mxu0
    %v191 = vld [vmem:[%s2] sm:$0xff]
    %v192 = vld [vmem:[%s2 + $0x8] sm:$0xff]
    %v193 = vld [vmem:[%s2 + $0x10] sm:$0xff]
    %v194 = vld [vmem:[%s2 + $0x18] sm:$0xff]
    %195 = vxpose.xlu0.b32.start [1/16] %v191, 128
    %196 = vxpose.xlu0.b32.cont [2/16] %v192, 128
    %197 = vxpose.xlu0.b32.cont [3/16] %v193, 128
    %198 = vxpose.xlu0.b32.cont [4/16] %v194, 128
    %199 = vxpose.xlu0.b32.cont [5/16] 0.0, 128
    %200 = vxpose.xlu0.b32.cont [6/16] 0.0, 128
    %201 = vxpose.xlu0.b32.cont [7/16] 0.0, 128
    %202 = vxpose.xlu0.b32.cont [8/16] 0.0, 128
    %203 = vxpose.xlu0.b32.cont [9/16] 0.0, 128
    %204 = vxpose.xlu0.b32.cont [10/16] 0.0, 128
    %205 = vxpose.xlu0.b32.cont [11/16] 0.0, 128
    %206 = vxpose.xlu0.b32.cont [12/16] 0.0, 128
    %207 = vxpose.xlu0.b32.cont [13/16] 0.0, 128
    %208 = vxpose.xlu0.b32.cont [14/16] 0.0, 128
    %209 = vxpose.xlu0.b32.cont [15/16] 0.0, 128
    %210 = vxpose.xlu0.b32.end [16/16] 0.0, 128
    %v211 = vpop.trf.xlu0
    %v212 = vpop.trf.xlu0
    %v213 = vpop.trf.xlu0
    %v214 = vpop.trf.xlu0
    %v215 = vpop.trf.xlu0
    %v216 = vpop.trf.xlu0
    %v217 = vpop.trf.xlu0
    %v218 = vpop.trf.xlu0
    %v219 = vpop.trf.xlu0
    %v220 = vpop.trf.xlu0
    %v221 = vpop.trf.xlu0
    %v222 = vpop.trf.xlu0
    %v223 = vpop.trf.xlu0
    %v224 = vpop.trf.xlu0
    %v225 = vpop.trf.xlu0
    %v226 = vpop.trf.xlu0
    %v228 = vsel %vm30, %v211, 0
    %v231 = vsel %vm30, %v212, 0
    %v234 = vsel %vm30, %v213, 0
    %v237 = vsel %vm30, %v214, 0
    %239 = vmatprep.subr.mxu0 0.0
    %240 = vmatpush1.xpose.msra.mxu0 %v32
    %241 = vmatprep.subr.mxu0 0.0
    %242 = vmatpush1.xpose.msra.mxu0 %v35
    %243 = vmatprep.subr.mxu0 0.0
    %244 = vmatpush1.xpose.msra.mxu0 0.0
    %245 = vmatprep.subr.mxu0 0.0
    %246 = vmatpush1.xpose.msra.mxu0 0.0
    %247 = vmatprep.subr.mxu0 0.0
    %248 = vmatpush1.xpose.msra.mxu0 0.0
    %249 = vmatprep.subr.mxu0 0.0
    %250 = vmatpush1.xpose.msra.mxu0 0.0
    %251 = vmatprep.subr.mxu0 0.0
    %252 = vmatpush1.xpose.msra.mxu0 0.0
    %253 = vmatprep.subr.mxu0 0.0
    %254 = vmatpush1.xpose.msra.mxu0 0.0
    %255 = vmatprep.subr.mxu0 0.0
    %256 = vmatpush1.xpose.msra.mxu0 0.0
    %257 = vmatprep.subr.mxu0 0.0
    %258 = vmatpush1.xpose.msra.mxu0 0.0
    %259 = vmatprep.subr.mxu0 0.0
    %260 = vmatpush1.xpose.msra.mxu0 0.0
    %261 = vmatprep.subr.mxu0 0.0
    %262 = vmatpush1.xpose.msra.mxu0 0.0
    %263 = vmatprep.subr.mxu0 0.0
    %264 = vmatpush1.xpose.msra.mxu0 0.0
    %265 = vmatprep.subr.mxu0 0.0
    %266 = vmatpush1.xpose.msra.mxu0 0.0
    %267 = vmatprep.subr.mxu0 0.0
    %268 = vmatpush1.xpose.msra.mxu0 0.0
    %269 = vmatprep.subr.mxu0 0.0
    %270 = vmatpush1.xpose.msra.mxu0 0.0
    %271 = vmatprep.subr.mxu0 0.0
    %272 = vmatpush1.xpose.msra.mxu0 0.0
    %273 = vmatprep.subr.mxu0 0.0
    %274 = vmatpush1.xpose.msra.mxu0 0.0
    %275 = vmatprep.subr.mxu0 0.0
    %276 = vmatpush1.xpose.msra.mxu0 0.0
    %277 = vmatprep.subr.mxu0 0.0
    %278 = vmatpush1.xpose.msra.mxu0 0.0
    %279 = vmatprep.subr.mxu0 0.0
    %280 = vmatpush1.xpose.msra.mxu0 0.0
    %281 = vmatprep.subr.mxu0 0.0
    %282 = vmatpush1.xpose.msra.mxu0 0.0
    %283 = vmatprep.subr.mxu0 0.0
    %284 = vmatpush1.xpose.msra.mxu0 0.0
    %285 = vmatprep.subr.mxu0 0.0
    %286 = vmatpush1.xpose.msra.mxu0 0.0
    %287 = vmatprep.subr.mxu0 0.0
    %288 = vmatpush1.xpose.msra.mxu0 0.0
    %289 = vmatprep.subr.mxu0 0.0
    %290 = vmatpush1.xpose.msra.mxu0 0.0
    %291 = vmatprep.subr.mxu0 0.0
    %292 = vmatpush1.xpose.msra.mxu0 0.0
    %293 = vmatprep.subr.mxu0 0.0
    %294 = vmatpush1.xpose.msra.mxu0 0.0
    %295 = vmatprep.subr.mxu0 0.0
    %296 = vmatpush1.xpose.msra.mxu0 0.0
    %297 = vmatprep.subr.mxu0 0.0
    %298 = vmatpush1.xpose.msra.mxu0 0.0
    %299 = vmatprep.subr.mxu0 0.0
    %300 = vmatpush1.xpose.msra.mxu0 0.0
    %301 = vmatprep.subr.mxu0 0.0
    %302 = vmatpush1.xpose.msra.mxu0 0.0
    %303 = vmatprep.mubr.f32.mxu0 0.0
    %304 = vmatmul.mubr.f32.gmra.mrb[0].mxu0 %v228
    %v305 = vpop.f32.mrb[0].mxu0
    %v306 = vadd.f32 0.0, %v305
    %v307 = vpop.f32.mrb[0].mxu0
    %308 = vmatprep.mubr.f32.mxu0 0.0
    %309 = vmatmul.mubr.f32.gmra.mrb[0].mxu0 %v231
    %v310 = vpop.f32.mrb[0].mxu0
    %v311 = vadd.f32 0.0, %v310
    %v312 = vpop.f32.mrb[0].mxu0
    %313 = vmatprep.mubr.f32.mxu0 0.0
    %314 = vmatmul.mubr.f32.gmra.mrb[0].mxu0 %v234
    %v315 = vpop.f32.mrb[0].mxu0
    %v316 = vadd.f32 0.0, %v315
    %v317 = vpop.f32.mrb[0].mxu0
    %318 = vmatprep.mubr.f32.mxu0 0.0
    %319 = vmatmul.mubr.f32.gmra.mrb[0].mxu0 %v237
    %v320 = vpop.f32.mrb[0].mxu0
    %v321 = vadd.f32 0.0, %v320
    %v322 = vpop.f32.mrb[0].mxu0
    %323 = vdwg.mxu0
    %v324 = vld [vmem:[%s5] sm:$0xff]
    %v325 = vld [vmem:[%s5 + $0x8] sm:$0xff]
    %v326 = vld [vmem:[%s5 + $0x10] sm:$0xff]
    %v327 = vld [vmem:[%s5 + $0x18] sm:$0xff]
    %v328 = vld [vmem:[%s5 + $0x20] sm:$0xff]
    %v329 = vld [vmem:[%s5 + $0x28] sm:$0xff]
    %v330 = vld [vmem:[%s5 + $0x30] sm:$0xff]
    %v331 = vld [vmem:[%s5 + $0x38] sm:$0xff]
    %v332 = vmul.f32 %v104, %v324
    %v333 = vmul.f32 %v109, %v325
    %v334 = vmul.f32 %v104, %v326
    %v335 = vmul.f32 %v109, %v327
    %v336 = vmul.f32 %v104, %v328
    %v337 = vmul.f32 %v109, %v329
    %v338 = vmul.f32 %v104, %v330
    %v339 = vmul.f32 %v109, %v331
    %v340 = vld [vmem:[%s4] sm:$0xff]
    %v341 = vld [vmem:[%s4 + $0x8] sm:$0xff]
    %v342 = vld [vmem:[%s4 + $0x10] sm:$0xff]
    %v343 = vld [vmem:[%s4 + $0x18] sm:$0xff]
    %v344 = vld [vmem:[%s4 + $0x20] sm:$0xff]
    %v345 = vld [vmem:[%s4 + $0x28] sm:$0xff]
    %v346 = vld [vmem:[%s4 + $0x30] sm:$0xff]
    %v347 = vld [vmem:[%s4 + $0x38] sm:$0xff]
    %v349 = vsel %vm30, %v332, 0
    %v352 = vsel %vm30, %v333, 0
    %v355 = vsel %vm30, %v334, 0
    %v358 = vsel %vm30, %v335, 0
    %v361 = vsel %vm30, %v336, 0
    %v364 = vsel %vm30, %v337, 0
    %v367 = vsel %vm30, %v338, 0
    %v370 = vsel %vm30, %v339, 0
    %372 = vmatprep.subr.mxu0 0.0
    %373 = vmatpush1.msra.mxu0 %v306
    %374 = vmatprep.subr.mxu0 0.0
    %375 = vmatpush1.msra.mxu0 %v311
    %376 = vmatprep.subr.mxu0 0.0
    %377 = vmatpush1.msra.mxu0 %v316
    %378 = vmatprep.subr.mxu0 0.0
    %379 = vmatpush1.msra.mxu0 %v321
    %380 = vmatprep.subr.mxu0 0.0
    %381 = vmatpush1.msra.mxu0 0.0
    %382 = vmatprep.subr.mxu0 0.0
    %383 = vmatpush1.msra.mxu0 0.0
    %384 = vmatprep.subr.mxu0 0.0
    %385 = vmatpush1.msra.mxu0 0.0
    %386 = vmatprep.subr.mxu0 0.0
    %387 = vmatpush1.msra.mxu0 0.0
    %388 = vmatprep.subr.mxu0 0.0
    %389 = vmatpush1.msra.mxu0 0.0
    %390 = vmatprep.subr.mxu0 0.0
    %391 = vmatpush1.msra.mxu0 0.0
    %392 = vmatprep.subr.mxu0 0.0
    %393 = vmatpush1.msra.mxu0 0.0
    %394 = vmatprep.subr.mxu0 0.0
    %395 = vmatpush1.msra.mxu0 0.0
    %396 = vmatprep.subr.mxu0 0.0
    %397 = vmatpush1.msra.mxu0 0.0
    %398 = vmatprep.subr.mxu0 0.0
    %399 = vmatpush1.msra.mxu0 0.0
    %400 = vmatprep.subr.mxu0 0.0
    %401 = vmatpush1.msra.mxu0 0.0
    %402 = vmatprep.subr.mxu0 0.0
    %403 = vmatpush1.msra.mxu0 0.0
    %404 = vmatprep.subr.mxu0 0.0
    %405 = vmatpush1.msra.mxu0 0.0
    %406 = vmatprep.subr.mxu0 0.0
    %407 = vmatpush1.msra.mxu0 0.0
    %408 = vmatprep.subr.mxu0 0.0
    %409 = vmatpush1.msra.mxu0 0.0
    %410 = vmatprep.subr.mxu0 0.0
    %411 = vmatpush1.msra.mxu0 0.0
    %412 = vmatprep.subr.mxu0 0.0
    %413 = vmatpush1.msra.mxu0 0.0
    %414 = vmatprep.subr.mxu0 0.0
    %415 = vmatpush1.msra.mxu0 0.0
    %416 = vmatprep.subr.mxu0 0.0
    %417 = vmatpush1.msra.mxu0 0.0
    %418 = vmatprep.subr.mxu0 0.0
    %419 = vmatpush1.msra.mxu0 0.0
    %420 = vmatprep.subr.mxu0 0.0
    %421 = vmatpush1.msra.mxu0 0.0
    %422 = vmatprep.subr.mxu0 0.0
    %423 = vmatpush1.msra.mxu0 0.0
    %424 = vmatprep.subr.mxu0 0.0
    %425 = vmatpush1.msra.mxu0 0.0
    %426 = vmatprep.subr.mxu0 0.0
    %427 = vmatpush1.msra.mxu0 0.0
    %428 = vmatprep.subr.mxu0 0.0
    %429 = vmatpush1.msra.mxu0 0.0
    %430 = vmatprep.subr.mxu0 0.0
    %431 = vmatpush1.msra.mxu0 0.0
    %432 = vmatprep.subr.mxu0 0.0
    %433 = vmatpush1.msra.mxu0 0.0
    %434 = vmatprep.subr.mxu0 0.0
    %435 = vmatpush1.msra.mxu0 0.0
    %436 = vmatprep.mubr.f32.mxu0 0.0
    %437 = vmatmul.mubr.f32.gmra.mrb[0].mxu0 %v349
    %v438 = vpop.f32.mrb[0].mxu0
    %v439 = vadd.f32 %v340, %v438
    %v440 = vpop.f32.mrb[0].mxu0
    %441 = vmatprep.mubr.f32.mxu0 0.0
    %442 = vmatmul.mubr.f32.gmra.mrb[0].mxu0 %v352
    %v443 = vpop.f32.mrb[0].mxu0
    %v444 = vadd.f32 %v341, %v443
    %v445 = vpop.f32.mrb[0].mxu0
    %446 = vmatprep.mubr.f32.mxu0 0.0
    %447 = vmatmul.mubr.f32.gmra.mrb[0].mxu0 %v355
    %v448 = vpop.f32.mrb[0].mxu0
    %v449 = vadd.f32 %v342, %v448
    %v450 = vpop.f32.mrb[0].mxu0
    %451 = vmatprep.mubr.f32.mxu0 0.0
    %452 = vmatmul.mubr.f32.gmra.mrb[0].mxu0 %v358
    %v453 = vpop.f32.mrb[0].mxu0
    %v454 = vadd.f32 %v343, %v453
    %v455 = vpop.f32.mrb[0].mxu0
    %456 = vmatprep.mubr.f32.mxu0 0.0
    %457 = vmatmul.mubr.f32.gmra.mrb[0].mxu0 %v361
    %v458 = vpop.f32.mrb[0].mxu0
    %v459 = vadd.f32 %v344, %v458
    %v460 = vpop.f32.mrb[0].mxu0
    %461 = vmatprep.mubr.f32.mxu0 0.0
    %462 = vmatmul.mubr.f32.gmra.mrb[0].mxu0 %v364
    %v463 = vpop.f32.mrb[0].mxu0
    %v464 = vadd.f32 %v345, %v463
    %v465 = vpop.f32.mrb[0].mxu0
    %466 = vmatprep.mubr.f32.mxu0 0.0
    %467 = vmatmul.mubr.f32.gmra.mrb[0].mxu0 %v367
    %v468 = vpop.f32.mrb[0].mxu0
    %v469 = vadd.f32 %v346, %v468
    %v470 = vpop.f32.mrb[0].mxu0
    %471 = vmatprep.mubr.f32.mxu0 0.0
    %472 = vmatmul.mubr.f32.gmra.mrb[0].mxu0 %v370
    %v473 = vpop.f32.mrb[0].mxu0
    %v474 = vadd.f32 %v347, %v473
    %v475 = vpop.f32.mrb[0].mxu0
    %476 = vdwg.mxu0
    %vm477 = vcmask 130048
    %v478 = vsel %vm477, %v439, -inf
    %479 = vmax.xlane.f32.xlu0 %v478
    %v480 = vpop.xlane.xlu0 %479
    %v481 = vsel %vm477, %v444, -inf
    %482 = vmax.xlane.f32.xlu0 %v481
    %v483 = vpop.xlane.xlu0 %482
    %v484 = vsel %vm477, %v449, -inf
    %485 = vmax.xlane.f32.xlu0 %v484
    %v486 = vpop.xlane.xlu0 %485
    %v487 = vsel %vm477, %v454, -inf
    %488 = vmax.xlane.f32.xlu0 %v487
    %v489 = vpop.xlane.xlu0 %488
    %v490 = vsel %vm477, %v459, -inf
    %491 = vmax.xlane.f32.xlu0 %v490
    %v492 = vpop.xlane.xlu0 %491
    %v493 = vsel %vm477, %v464, -inf
    %494 = vmax.xlane.f32.xlu0 %v493
    %v495 = vpop.xlane.xlu0 %494
    %v496 = vsel %vm477, %v469, -inf
    %497 = vmax.xlane.f32.xlu0 %v496
    %v498 = vpop.xlane.xlu0 %497
    %v499 = vsel %vm477, %v474, -inf
    %500 = vmax.xlane.f32.xlu0 %v499
    %v501 = vpop.xlane.xlu0 %500
    %v502 = vsub.f32 %v439, %v480
    %v503 = vsub.f32 %v444, %v483
    %v504 = vsub.f32 %v449, %v486
    %v505 = vsub.f32 %v454, %v489
    %v506 = vsub.f32 %v459, %v492
    %v507 = vsub.f32 %v464, %v495
    %v508 = vsub.f32 %v469, %v498
    %v509 = vsub.f32 %v474, %v501
    %v510 = vmul.f32 %v502, 1.442695
    %v511 = vpow.pop %v510
    %v512 = vmul.f32 %v503, 1.442695
    %v513 = vpow.pop %v512
    %v514 = vmul.f32 %v504, 1.442695
    %v515 = vpow.pop %v514
    %v516 = vmul.f32 %v505, 1.442695
    %v517 = vpow.pop %v516
    %v518 = vmul.f32 %v506, 1.442695
    %v519 = vpow.pop %v518
    %v520 = vmul.f32 %v507, 1.442695
    %v521 = vpow.pop %v520
    %v522 = vmul.f32 %v508, 1.442695
    %v523 = vpow.pop %v522
    %v524 = vmul.f32 %v509, 1.442695
    %v525 = vpow.pop %v524
    %v526 = vsel %vm477, %v511, 0.0
    %527 = vadd.xlane.f32.xlu0 %v526
    %v528 = vpop.xlane.xlu0 %527
    %v529 = vsel %vm477, %v513, 0.0
    %530 = vadd.xlane.f32.xlu0 %v529
    %v531 = vpop.xlane.xlu0 %530
    %v532 = vsel %vm477, %v515, 0.0
    %533 = vadd.xlane.f32.xlu0 %v532
    %v534 = vpop.xlane.xlu0 %533
    %v535 = vsel %vm477, %v517, 0.0
    %536 = vadd.xlane.f32.xlu0 %v535
    %v537 = vpop.xlane.xlu0 %536
    %v538 = vsel %vm477, %v519, 0.0
    %539 = vadd.xlane.f32.xlu0 %v538
    %v540 = vpop.xlane.xlu0 %539
    %v541 = vsel %vm477, %v521, 0.0
    %542 = vadd.xlane.f32.xlu0 %v541
    %v543 = vpop.xlane.xlu0 %542
    %v544 = vsel %vm477, %v523, 0.0
    %545 = vadd.xlane.f32.xlu0 %v544
    %v546 = vpop.xlane.xlu0 %545
    %v547 = vsel %vm477, %v525, 0.0
    %548 = vadd.xlane.f32.xlu0 %v547
    %v549 = vpop.xlane.xlu0 %548
    %v550 = vrcp.pop %v528
    %v551 = vrcp.pop %v531
    %v552 = vrcp.pop %v534
    %v553 = vrcp.pop %v537
    %v554 = vrcp.pop %v540
    %v555 = vrcp.pop %v543
    %v556 = vrcp.pop %v546
    %v557 = vrcp.pop %v549
    %v558 = vmul.f32 %v511, %v550
    %v559 = vmul.f32 %v513, %v551
    %v560 = vmul.f32 %v515, %v552
    %v561 = vmul.f32 %v517, %v553
    %v562 = vmul.f32 %v519, %v554
    %v563 = vmul.f32 %v521, %v555
    %v564 = vmul.f32 %v523, %v556
    %v565 = vmul.f32 %v525, %v557
    %v567 = vsel %vm477, %v558, 0
    %v570 = vsel %vm477, %v559, 0
    %v573 = vsel %vm477, %v560, 0
    %v576 = vsel %vm477, %v561, 0
    %v579 = vsel %vm477, %v562, 0
    %v582 = vsel %vm477, %v563, 0
    %v585 = vsel %vm477, %v564, 0
    %v588 = vsel %vm477, %v565, 0
    %590 = vmatprep.subr.mxu0 0.0
    %591 = vmatpush1.msra.mxu0 %v183
    %592 = vmatprep.subr.mxu0 0.0
    %593 = vmatpush1.msra.mxu0 %v188
    %594 = vmatprep.subr.mxu0 0.0
    %595 = vmatpush1.msra.mxu0 0.0
    %596 = vmatprep.subr.mxu0 0.0
    %597 = vmatpush1.msra.mxu0 0.0
    %598 = vmatprep.subr.mxu0 0.0
    %599 = vmatpush1.msra.mxu0 0.0
    %600 = vmatprep.subr.mxu0 0.0
    %601 = vmatpush1.msra.mxu0 0.0
    %602 = vmatprep.subr.mxu0 0.0
    %603 = vmatpush1.msra.mxu0 0.0
    %604 = vmatprep.subr.mxu0 0.0
    %605 = vmatpush1.msra.mxu0 0.0
    %606 = vmatprep.subr.mxu0 0.0
    %607 = vmatpush1.msra.mxu0 0.0
    %608 = vmatprep.subr.mxu0 0.0
    %609 = vmatpush1.msra.mxu0 0.0
    %610 = vmatprep.subr.mxu0 0.0
    %611 = vmatpush1.msra.mxu0 0.0
    %612 = vmatprep.subr.mxu0 0.0
    %613 = vmatpush1.msra.mxu0 0.0
    %614 = vmatprep.subr.mxu0 0.0
    %615 = vmatpush1.msra.mxu0 0.0
    %616 = vmatprep.subr.mxu0 0.0
    %617 = vmatpush1.msra.mxu0 0.0
    %618 = vmatprep.subr.mxu0 0.0
    %619 = vmatpush1.msra.mxu0 0.0
    %620 = vmatprep.subr.mxu0 0.0
    %621 = vmatpush1.msra.mxu0 0.0
    %622 = vmatprep.subr.mxu0 0.0
    %623 = vmatpush1.msra.mxu0 0.0
    %624 = vmatprep.subr.mxu0 0.0
    %625 = vmatpush1.msra.mxu0 0.0
    %626 = vmatprep.subr.mxu0 0.0
    %627 = vmatpush1.msra.mxu0 0.0
    %628 = vmatprep.subr.mxu0 0.0
    %629 = vmatpush1.msra.mxu0 0.0
    %630 = vmatprep.subr.mxu0 0.0
    %631 = vmatpush1.msra.mxu0 0.0
    %632 = vmatprep.subr.mxu0 0.0
    %633 = vmatpush1.msra.mxu0 0.0
    %634 = vmatprep.subr.mxu0 0.0
    %635 = vmatpush1.msra.mxu0 0.0
    %636 = vmatprep.subr.mxu0 0.0
    %637 = vmatpush1.msra.mxu0 0.0
    %638 = vmatprep.subr.mxu0 0.0
    %639 = vmatpush1.msra.mxu0 0.0
    %640 = vmatprep.subr.mxu0 0.0
    %641 = vmatpush1.msra.mxu0 0.0
    %642 = vmatprep.subr.mxu0 0.0
    %643 = vmatpush1.msra.mxu0 0.0
    %644 = vmatprep.subr.mxu0 0.0
    %645 = vmatpush1.msra.mxu0 0.0
    %646 = vmatprep.subr.mxu0 0.0
    %647 = vmatpush1.msra.mxu0 0.0
    %648 = vmatprep.subr.mxu0 0.0
    %649 = vmatpush1.msra.mxu0 0.0
    %650 = vmatprep.subr.mxu0 0.0
    %651 = vmatpush1.msra.mxu0 0.0
    %652 = vmatprep.subr.mxu0 0.0
    %653 = vmatpush1.msra.mxu0 0.0
    %654 = vmatprep.mubr.f32.mxu0 0.0
    %655 = vmatmul.mubr.f32.gmra.mrb[0].mxu0 %v567
    %v656 = vpop.f32.mrb[0].mxu0
    %v657 = vadd.f32 0.0, %v656
    %v658 = vpop.f32.mrb[0].mxu0
    %659 = vmatprep.mubr.f32.mxu0 0.0
    %660 = vmatmul.mubr.f32.gmra.mrb[0].mxu0 %v570
    %v661 = vpop.f32.mrb[0].mxu0
    %v662 = vadd.f32 0.0, %v661
    %v663 = vpop.f32.mrb[0].mxu0
    %664 = vmatprep.mubr.f32.mxu0 0.0
    %665 = vmatmul.mubr.f32.gmra.mrb[0].mxu0 %v573
    %v666 = vpop.f32.mrb[0].mxu0
    %v667 = vadd.f32 0.0, %v666
    %v668 = vpop.f32.mrb[0].mxu0
    %669 = vmatprep.mubr.f32.mxu0 0.0
    %670 = vmatmul.mubr.f32.gmra.mrb[0].mxu0 %v576
    %v671 = vpop.f32.mrb[0].mxu0
    %v672 = vadd.f32 0.0, %v671
    %v673 = vpop.f32.mrb[0].mxu0
    %674 = vmatprep.mubr.f32.mxu0 0.0
    %675 = vmatmul.mubr.f32.gmra.mrb[0].mxu0 %v579
    %v676 = vpop.f32.mrb[0].mxu0
    %v677 = vadd.f32 0.0, %v676
    %v678 = vpop.f32.mrb[0].mxu0
    %679 = vmatprep.mubr.f32.mxu0 0.0
    %680 = vmatmul.mubr.f32.gmra.mrb[0].mxu0 %v582
    %v681 = vpop.f32.mrb[0].mxu0
    %v682 = vadd.f32 0.0, %v681
    %v683 = vpop.f32.mrb[0].mxu0
    %684 = vmatprep.mubr.f32.mxu0 0.0
    %685 = vmatmul.mubr.f32.gmra.mrb[0].mxu0 %v585
    %v686 = vpop.f32.mrb[0].mxu0
    %v687 = vadd.f32 0.0, %v686
    %v688 = vpop.f32.mrb[0].mxu0
    %689 = vmatprep.mubr.f32.mxu0 0.0
    %690 = vmatmul.mubr.f32.gmra.mrb[0].mxu0 %v588
    %v691 = vpop.f32.mrb[0].mxu0
    %v692 = vadd.f32 0.0, %v691
    %v693 = vpop.f32.mrb[0].mxu0
    %694 = vdwg.mxu0
    %v695 = vmul.f32 %v657, %v324
    %v696 = vmul.f32 %v662, %v325
    %v697 = vmul.f32 %v667, %v326
    %v698 = vmul.f32 %v672, %v327
    %v699 = vmul.f32 %v677, %v328
    %v700 = vmul.f32 %v682, %v329
    %v701 = vmul.f32 %v687, %v330
    %v702 = vmul.f32 %v692, %v331
    %v703 = vadd.f32 %v695, %v697
    %v704 = vadd.f32 %v696, %v698
    %v705 = vadd.f32 %v703, %v699
    %v706 = vadd.f32 %v704, %v700
    %v707 = vadd.f32 %v705, %v701
    %v708 = vadd.f32 %v706, %v702
    %709 = vst.msk [vmem:[#allocation2] sm:$0xff] %vm30, %v707
    %710 = vst.msk [vmem:[#allocation2 + $0x8] sm:$0xff] %vm30, %v708
    // Predicated region
    $region26: #{tpu_custom_call.1} parent=1 // pred_check
      _
    $region27: #{tpu_custom_call.1} parent=1 // pred_check_branch
      %712 = sbr.rel (0) target = $region29
    $region28: #{tpu_custom_call.1} parent=1 // pred_region
      %s714 = ssub.s32 256, 256
      %715 = vsyncadd [#allocation3], %s714
      %s716 = sshll.u32 [#allocation2], 4
      %s717 = int_to_ptr.vmem [resolvable:$true] %s716
      %722 = dma.vmem_to_hbm [thread:$0]  %s717, 256, %s6, [#allocation3], 128, 128, 8
    $region29: #{tpu_custom_call.1} parent=1 // pred_fallthru
      _
    // Predicated region
    $region30: #{tpu_custom_call.1} parent=1 // pred_check
      _
    $region31: #{tpu_custom_call.1} parent=1 // pred_check_branch
      %724 = sbr.rel (0) target = $region33
    $region32: #{tpu_custom_call.1} parent=1 // pred_region
      %725 = dma.done [#allocation3], 256
    $region33: #{tpu_custom_call.1} parent=1 // pred_fallthru
      _
    %726 = vsyncpa [#allocation3], 1

</llo_original>
